<compile_context>
chip_gen: v6e
topology: v6e:2x2x1
jax: 0.10.0
libtpu: 0.0.40
codegen_flags: <defaults>
</compile_context>

<pallas_src>
import functools
import math

import jax
import jax.numpy as jnp
from jax.experimental import pallas as pl
from jax.experimental.pallas import tpu as pltpu


def _round_up(x, m):
    return ((x + m - 1) // m) * m


def _mlm_head_kernel(x_ref, w_ref, b_ref,              # inputs
                     preds_ref, lse_ref,                # outputs
                     m_sc, l_sc, amax_sc,               # scratch
                     *, tile_v, compute_lse):
    j = pl.program_id(1)
    nv = pl.num_programs(1)

    @pl.when(j == 0)
    def _init():
        m_sc[...] = jnp.full(m_sc.shape, -jnp.inf, dtype=jnp.float32)
        amax_sc[...] = jnp.zeros(amax_sc.shape, dtype=jnp.int32)
        if compute_lse:
            l_sc[...] = jnp.zeros(l_sc.shape, dtype=jnp.float32)

    x = x_ref[...]                                    # (tr, H)  bf16
    w = w_ref[...]                                    # (tv, H)  bf16 (embed layout)
    # logits = x @ w.T, contracting the hidden dims; f32 accumulation on MXU.
    logits = jax.lax.dot_general(
        x, w, (((1,), (1,)), ((), ())),
        preferred_element_type=jnp.float32)
    # Bias is fully resident in VMEM; pick this vocab tile's row dynamically.
    logits = logits + b_ref[pl.ds(j, 1), :]           # (tr, tv) + (1, tv)
    # Padded vocab columns carry bias = -inf so they never win argmax and
    # contribute exp(-inf) = 0 to the sum-exp: no masking needed here.

    # Global vocab column index for this tile, built once as a (1, tv) row.
    col = jax.lax.broadcasted_iota(jnp.int32, (1, tile_v), 1) + j * tile_v
    colf = col.astype(jnp.float32)     # exact for vocab < 2**24 (guarded in wrapper)

    # ---- streaming argmax over vocab (first-occurrence on ties) ----
    tile_max = jnp.max(logits, axis=-1, keepdims=True)                  # (tr, 1)
    cand = jnp.where(logits == tile_max, colf, jnp.float32(2 ** 30))
    tile_arg = jnp.min(cand, axis=-1, keepdims=True).astype(jnp.int32)  # (tr, 1)

    m_old = m_sc[...]
    m_new = jnp.maximum(m_old, tile_max)
    amax_sc[...] = jnp.where(tile_max > m_old, tile_arg, amax_sc[...])
    m_sc[...] = m_new

    # ---- streaming log-sum-exp (skipped entirely on the preds-only path) ----
    if compute_lse:
        alpha = jnp.exp(m_old - m_new)
        l_sc[...] = l_sc[...] * alpha + jnp.sum(jnp.exp(logits - m_new),
                                                axis=-1, keepdims=True)

    @pl.when(j == nv - 1)
    def _finalize():
        preds_ref[...] = amax_sc[...]
        if compute_lse:
            lse_ref[...] = m_sc[...] + jnp.log(l_sc[...])
        else:
            lse_ref[...] = jnp.zeros(lse_ref.shape, dtype=jnp.float32)


def simple_mlm_head_forward(sequence_output, decoder_weight, bias,
                            labels=None, ignore_idx=0, include=None,
                            sample_wise=False,
                            tile_rows=768, tile_v=1024,
                            compute_dtype=jnp.bfloat16):
    """Forward of SimpleMLMHead.

    sequence_output: (..., H); decoder_weight: (V, H) (== embed.weight);
    bias: (V,); labels: same leading shape as sequence_output (2-D [B,S] for
    the errors/include path), or None.
    """
    lead_shape = sequence_output.shape[:-1]
    hidden = sequence_output.shape[-1]
    vocab = decoder_weight.shape[0]
    rows = int(math.prod(lead_shape))

    # ---- tile selection (sublane/lane aligned) ----
    tile_rows = _round_up(int(tile_rows), 8)
    tile_v = _round_up(int(tile_v), 128)
    tr = min(tile_rows, _round_up(rows, 8))
    tv = min(tile_v, _round_up(vocab, 128))
    rows_p = _round_up(rows, tr)           # pad rows -> no ragged row tiles
    vocab_p = _round_up(vocab, tv)         # pad vocab -> no ragged vocab tiles
    nv = vocab_p // tv
    assert vocab_p < 2 ** 24, "argmax tie-break encodes columns in f32 (< 2^24)"

    op_bytes = jnp.dtype(compute_dtype).itemsize

    # ---- host-side prep: cast to compute dtype, pad rows/vocab ----
    x2 = sequence_output.reshape(rows, hidden).astype(compute_dtype)
    if rows_p != rows:
        x2 = jnp.pad(x2, ((0, rows_p - rows), (0, 0)))
    w2 = decoder_weight.astype(compute_dtype)
    if vocab_p != vocab:
        w2 = jnp.pad(w2, ((0, vocab_p - vocab), (0, 0)))
    b1 = bias.astype(jnp.float32)
    if vocab_p != vocab:
        b1 = jnp.pad(b1, (0, vocab_p - vocab), constant_values=float("-inf"))
    b2 = b1.reshape(nv, tv)                # resident bias table, row per vocab tile

    grid = (rows_p // tr, nv)
    compute_lse = labels is not None

    kernel = functools.partial(_mlm_head_kernel, tile_v=tv,
                               compute_lse=compute_lse)

    n_row_tiles = rows_p // tr
    cost = pl.CostEstimate(
        flops=2 * rows_p * hidden * vocab_p,
        transcendentals=(rows_p * vocab_p) if compute_lse else 0,
        # W is re-streamed once per row tile; x once; bias resident (read once).
        bytes_accessed=(rows_p * hidden * op_bytes
                        + n_row_tiles * vocab_p * hidden * op_bytes
                        + vocab_p * 4
                        + rows_p * 8))

    # VMEM budget: double-buffered x/W tiles + resident bias + f32 logits and
    # a few elementwise temps + tiny per-row scratch/outputs, plus headroom.
    vmem_needed = (2 * (tr + tv) * hidden * op_bytes
                   + vocab_p * 4
                   + 4 * tr * tv * 4
                   + 8 * tr * 4)
    vmem_limit = int(min(max(vmem_needed + (2 << 20), 32 << 20), 96 << 20))

    preds_flat, lse_flat = pl.pallas_call(
        kernel,
        out_shape=(jax.ShapeDtypeStruct((rows_p, 1), jnp.int32),
                   jax.ShapeDtypeStruct((rows_p, 1), jnp.float32)),
        grid_spec=pltpu.PrefetchScalarGridSpec(
            num_scalar_prefetch=0,
            grid=grid,
            in_specs=[
                pl.BlockSpec((tr, hidden), lambda i, j: (i, 0)),   # activations
                pl.BlockSpec((tv, hidden), lambda i, j: (j, 0)),   # embedding rows
                pl.BlockSpec((nv, tv), lambda i, j: (0, 0)),       # resident bias
            ],
            out_specs=[
                pl.BlockSpec((tr, 1), lambda i, j: (i, 0)),        # preds
                pl.BlockSpec((tr, 1), lambda i, j: (i, 0)),        # per-token lse
            ],
            scratch_shapes=[
                pltpu.VMEM((tr, 1), jnp.float32),   # running max
                pltpu.VMEM((tr, 1), jnp.float32),   # running sum-exp
                pltpu.VMEM((tr, 1), jnp.int32),     # running argmax
            ]),
        compiler_params=pltpu.CompilerParams(
            dimension_semantics=("parallel", "arbitrary"),
            vmem_limit_bytes=vmem_limit),
        cost_estimate=cost,
    )(x2, w2, b2)

    preds = preds_flat[:rows, 0].reshape(lead_shape)
    if labels is None:
        return preds

    # ---- tiny O(rows) / O(rows*H) epilogue in plain JAX ----
    lab_flat = labels.reshape(rows).astype(jnp.int32)
    # Label logit = x . W[label] + bias[label]; same bf16 operands / f32 accum
    # as the kernel, but computed once per token (moved out of the vocab loop).
    lab_logit = jnp.einsum("rh,rh->r", x2[:rows], w2[lab_flat],
                           preferred_element_type=jnp.float32)
    lab_logit = lab_logit + bias.astype(jnp.float32)[lab_flat]

    lse = lse_flat[:rows, 0]
    valid_flat = lab_flat != ignore_idx
    nll = jnp.where(valid_flat, lse - lab_logit, 0.0).reshape(lead_shape)

    valid = labels != ignore_idx
    if include is None:
        include = jnp.ones_like(labels[:, 0])
    errors = jnp.sum((preds != labels) & valid, axis=-1) * include

    if not sample_wise:
        # CrossEntropyLoss(ignore_index, reduction='mean'):
        # sum of NLL over non-ignored tokens / count of non-ignored tokens.
        loss = jnp.sum(nll) / jnp.sum(valid).astype(jnp.float32)
        return loss, errors
    else:
        sample_nll = jnp.sum(nll, axis=-1) * include.astype(jnp.float32)
        return sample_nll, errors


if __name__ == "__main__":
    # Small shapes; vocab (500) and rows (2*9=18) deliberately NOT tile-aligned
    # so the host-side padding paths (zero rows, -inf bias columns) are exercised.
    batch, seq, hidden, vocab = 2, 9, 32, 500
    ignore_idx = 0

    key = jax.random.PRNGKey(0)
    kw, kb, kt, kn = jax.random.split(key, 4)

    embed_w = jax.random.normal(kw, (vocab, hidden), jnp.float32) / math.sqrt(hidden)
    bias = 0.1 * jax.random.normal(kb, (vocab,), jnp.float32)

    # Activations strongly aligned with a known target embedding row so the
    # argmax has a large margin (no numerical-tie ambiguity in the check).
    target = jax.random.randint(kt, (batch, seq), 1, vocab, dtype=jnp.int32)
    x = 3.0 * embed_w[target] + 0.1 * jax.random.normal(
        kn, (batch, seq, hidden), jnp.float32)

    labels = target
    labels = labels.at[:, 0].set(ignore_idx)                  # some ignored tokens
    labels = labels.at[:, 1].set((target[:, 1] + 1) % vocab)  # some wrong labels

    tiles = dict(tile_rows=256, tile_v=128)   # small tiles -> 4 vocab tiles exercised

    loss, errors = simple_mlm_head_forward(
        x, embed_w, bias, labels=labels, ignore_idx=ignore_idx, **tiles)
    sample_nll, errors_sw = simple_mlm_head_forward(
        x, embed_w, bias, labels=labels, ignore_idx=ignore_idx,
        sample_wise=True, **tiles)
    preds_only = simple_mlm_head_forward(
        x, embed_w, bias, labels=None, ignore_idx=ignore_idx, **tiles)
    jax.block_until_ready((loss, errors, sample_nll, errors_sw, preds_only))

    # ---- pure-JAX reference (same bf16-quantized operands as the kernel) ----
    x_q = x.astype(jnp.bfloat16).astype(jnp.float32)
    w_q = embed_w.astype(jnp.bfloat16).astype(jnp.float32)
    logits = jnp.einsum("bsh,vh->bsv", x_q, w_q, precision="highest") + bias
    preds_ref = jnp.argmax(logits, axis=-1).astype(jnp.int32)
    lse_ref = jax.scipy.special.logsumexp(logits, axis=-1)
    lab_logit = jnp.take_along_axis(logits, labels[..., None], axis=-1)[..., 0]
    valid = labels != ignore_idx
    nll_ref = jnp.where(valid, lse_ref - lab_logit, 0.0)
    loss_ref = jnp.sum(nll_ref) / jnp.sum(valid).astype(jnp.float32)
    include_ref = jnp.ones_like(labels[:, 0])
    errors_ref = jnp.sum((preds_ref != labels) & valid, axis=-1) * include_ref
    sample_nll_ref = jnp.sum(nll_ref, axis=-1) * include_ref.astype(jnp.float32)

    assert jnp.array_equal(preds_only, preds_ref), "preds mismatch"
    assert jnp.array_equal(errors, errors_ref), "errors mismatch"
    assert jnp.array_equal(errors_sw, errors_ref), "errors (sample_wise) mismatch"
    assert jnp.allclose(loss, loss_ref, atol=5e-2, rtol=1e-2), "loss mismatch"
    assert jnp.allclose(sample_nll, sample_nll_ref, atol=1.5e-1, rtol=1e-2), \
        "sample-wise nll mismatch"

    print("KERNEL_OK")
</pallas_src>

<mosaic_0001>
module attributes {stable_mosaic.version = 11 : i64} {
  func.func @_mlm_head_kernel(%arg0: i32, %arg1: i32, %arg2: memref<24x32xbf16, #tpu.memory_space<vmem>>, %arg3: memref<128x32xbf16, #tpu.memory_space<vmem>>, %arg4: memref<4x128xf32, #tpu.memory_space<vmem>>, %arg5: memref<24x1xi32, #tpu.memory_space<vmem>>, %arg6: memref<24x1xf32, #tpu.memory_space<vmem>>, %arg7: memref<24x1xf32, #tpu.memory_space<vmem>>, %arg8: memref<24x1xf32, #tpu.memory_space<vmem>>, %arg9: memref<24x1xi32, #tpu.memory_space<vmem>>) attributes {dimension_semantics = [#tpu.dimension_semantics<parallel>, #tpu.dimension_semantics<arbitrary>], iteration_bounds = array<i64: 1, 4>, scalar_prefetch = 0 : i64, scratch_operands = 3 : i64, tpu.core_type = #tpu.core_type<tc>, window_params = [{transform_indices = @transform_0, window_bounds = array<i64: 24, 32>}, {transform_indices = @transform_1, window_bounds = array<i64: 128, 32>}, {pipeline_mode = #tpu.pipeline_mode<synchronous>, transform_indices = @transform_2, window_bounds = array<i64: 4, 128>}, {transform_indices = @transform_3, window_bounds = array<i64: 24, 1>}, {transform_indices = @transform_4, window_bounds = array<i64: 24, 1>}]} {
    %c0_i32 = arith.constant 0 : i32
    %0 = arith.cmpi eq, %arg1, %c0_i32 : i32
    %1 = arith.extui %0 : i1 to i32
    %c0_i32_0 = arith.constant 0 : i32
    %2 = arith.cmpi ne, %1, %c0_i32_0 : i32
    scf.if %2 {
      %cst_22 = arith.constant 0xFF800000 : f32
      %47 = vector.broadcast %cst_22 : f32 to vector<24x1xf32>
      %c0_23 = arith.constant 0 : index
      %c0_24 = arith.constant 0 : index
      %48 = vector.load %arg7[%c0_23, %c0_24] : memref<24x1xf32, #tpu.memory_space<vmem>>, vector<24x1xf32>
      tpu.vector_store %arg7[%c0_23, %c0_24], %47 {strides = array<i32>} : memref<24x1xf32, #tpu.memory_space<vmem>>, vector<24x1xf32>,
      %c0_i32_25 = arith.constant 0 : i32
      %49 = vector.broadcast %c0_i32_25 : i32 to vector<24x1xi32>
      %c0_26 = arith.constant 0 : index
      %c0_27 = arith.constant 0 : index
      %50 = vector.load %arg9[%c0_26, %c0_27] : memref<24x1xi32, #tpu.memory_space<vmem>>, vector<24x1xi32>
      tpu.vector_store %arg9[%c0_26, %c0_27], %49 {strides = array<i32>} : memref<24x1xi32, #tpu.memory_space<vmem>>, vector<24x1xi32>,
      %cst_28 = arith.constant 0.000000e+00 : f32
      %51 = vector.broadcast %cst_28 : f32 to vector<24x1xf32>
      %c0_29 = arith.constant 0 : index
      %c0_30 = arith.constant 0 : index
      %52 = vector.load %arg8[%c0_29, %c0_30] : memref<24x1xf32, #tpu.memory_space<vmem>>, vector<24x1xf32>
      tpu.vector_store %arg8[%c0_29, %c0_30], %51 {strides = array<i32>} : memref<24x1xf32, #tpu.memory_space<vmem>>, vector<24x1xf32>,
    } else {
    }
    %c0 = arith.constant 0 : index
    %c0_1 = arith.constant 0 : index
    %3 = vector.load %arg2[%c0, %c0_1] : memref<24x32xbf16, #tpu.memory_space<vmem>>, vector<24x32xbf16>
    %c0_2 = arith.constant 0 : index
    %c0_3 = arith.constant 0 : index
    %4 = vector.load %arg3[%c0_2, %c0_3] : memref<128x32xbf16, #tpu.memory_space<vmem>>, vector<128x32xbf16>
    %cst = arith.constant dense<0.000000e+00> : vector<24x128xf32>
    %5 = tpu.matmul %3, %4, %cst {dimension_numbers = #tpu.dot_dimension_numbers<[1], [1], [0], [0], [0, 0, 1, 0], [], []>} : vector<24x32xbf16>, vector<128x32xbf16>, vector<24x128xf32> -> vector<24x128xf32>
    %6 = arith.index_cast %arg1 : i32 to index
    %c0_4 = arith.constant 0 : index
    %7 = vector.load %arg4[%6, %c0_4] : memref<4x128xf32, #tpu.memory_space<vmem>>, vector<1x128xf32>
    %8 = vector.broadcast %7 : vector<1x128xf32> to vector<24x128xf32>
    %9 = arith.addf %5, %8 : vector<24x128xf32>
    %10 = tpu.iota {dimensions = array<i32: 1>} : vector<1x128xi32>
    %c128_i32 = arith.constant 128 : i32
    %11 = arith.muli %arg1, %c128_i32 : i32
    %12 = vector.broadcast %11 : i32 to vector<1x128xi32>
    %13 = arith.addi %10, %12 : vector<1x128xi32>
    %14 = arith.sitofp %13 : vector<1x128xi32> to vector<1x128xf32>
    %cst_5 = arith.constant dense<0xFF800000> : vector<24xf32>
    %15 = vector.multi_reduction <maximumf>, %9, %cst_5 [1] : vector<24x128xf32> to vector<24xf32>
    %16 = vector.shape_cast %15 : vector<24xf32> to vector<24x1xf32>
    %17 = vector.broadcast %16 : vector<24x1xf32> to vector<24x128xf32>
    %18 = arith.cmpf oeq, %9, %17 : vector<24x128xf32>
    %cst_6 = arith.constant 1.07374182E+9 : f32
    %19 = vector.shape_cast %14 : vector<1x128xf32> to vector<1x128xf32>
    %20 = vector.broadcast %19 : vector<1x128xf32> to vector<24x128xf32>
    %21 = vector.broadcast %cst_6 : f32 to vector<24x128xf32>
    %22 = arith.select %18, %20, %21 : vector<24x128xi1>, vector<24x128xf32>
    %cst_7 = arith.constant dense<0x7F800000> : vector<24xf32>
    %23 = vector.multi_reduction <minimumf>, %22, %cst_7 [1] : vector<24x128xf32> to vector<24xf32>
    %24 = vector.shape_cast %23 : vector<24xf32> to vector<24x1xf32>
    %25 = arith.fptosi %24 : vector<24x1xf32> to vector<24x1xi32>
    %c0_8 = arith.constant 0 : index
    %c0_9 = arith.constant 0 : index
    %26 = vector.load %arg7[%c0_8, %c0_9] : memref<24x1xf32, #tpu.memory_space<vmem>>, vector<24x1xf32>
    %27 = arith.maximumf %26, %16 : vector<24x1xf32>
    %28 = arith.cmpf ogt, %16, %26 : vector<24x1xf32>
    %c0_10 = arith.constant 0 : index
    %c0_11 = arith.constant 0 : index
    %29 = vector.load %arg9[%c0_10, %c0_11] : memref<24x1xi32, #tpu.memory_space<vmem>>, vector<24x1xi32>
    %30 = arith.select %28, %25, %29 : vector<24x1xi1>, vector<24x1xi32>
    %c0_12 = arith.constant 0 : index
    %c0_13 = arith.constant 0 : index
    %31 = vector.load %arg9[%c0_12, %c0_13] : memref<24x1xi32, #tpu.memory_space<vmem>>, vector<24x1xi32>
    tpu.vector_store %arg9[%c0_12, %c0_13], %30 {strides = array<i32>} : memref<24x1xi32, #tpu.memory_space<vmem>>, vector<24x1xi32>,
    %c0_14 = arith.constant 0 : index
    %c0_15 = arith.constant 0 : index
    %32 = vector.load %arg7[%c0_14, %c0_15] : memref<24x1xf32, #tpu.memory_space<vmem>>, vector<24x1xf32>
    tpu.vector_store %arg7[%c0_14, %c0_15], %27 {strides = array<i32>} : memref<24x1xf32, #tpu.memory_space<vmem>>, vector<24x1xf32>,
    %33 = arith.subf %26, %27 : vector<24x1xf32>
    %34 = math.exp %33 : vector<24x1xf32>
    %c0_16 = arith.constant 0 : index
    %c0_17 = arith.constant 0 : index
    %35 = vector.load %arg8[%c0_16, %c0_17] : memref<24x1xf32, #tpu.memory_space<vmem>>, vector<24x1xf32>
    %36 = arith.mulf %35, %34 : vector<24x1xf32>
    %37 = vector.broadcast %27 : vector<24x1xf32> to vector<24x128xf32>
    %38 = arith.subf %9, %37 : vector<24x128xf32>
    %39 = math.exp %38 : vector<24x128xf32>
    %cst_18 = arith.constant dense<0.000000e+00> : vector<24xf32>
    %40 = vector.multi_reduction <add>, %39, %cst_18 [1] : vector<24x128xf32> to vector<24xf32>
    %41 = vector.shape_cast %40 : vector<24xf32> to vector<24x1xf32>
    %42 = arith.addf %36, %41 : vector<24x1xf32>
    %c0_19 = arith.constant 0 : index
    %c0_20 = arith.constant 0 : index
    %43 = vector.load %arg8[%c0_19, %c0_20] : memref<24x1xf32, #tpu.memory_space<vmem>>, vector<24x1xf32>
    tpu.vector_store %arg8[%c0_19, %c0_20], %42 {strides = array<i32>} : memref<24x1xf32, #tpu.memory_space<vmem>>, vector<24x1xf32>,
    %c3_i32 = arith.constant 3 : i32
    %44 = arith.cmpi eq, %arg1, %c3_i32 : i32
    %45 = arith.extui %44 : i1 to i32
    %c0_i32_21 = arith.constant 0 : i32
    %46 = arith.cmpi ne, %45, %c0_i32_21 : i32
    scf.if %46 {
      %c0_22 = arith.constant 0 : index
      %c0_23 = arith.constant 0 : index
      %47 = vector.load %arg9[%c0_22, %c0_23] : memref<24x1xi32, #tpu.memory_space<vmem>>, vector<24x1xi32>
      %c0_24 = arith.constant 0 : index
      %c0_25 = arith.constant 0 : index
      %48 = vector.load %arg5[%c0_24, %c0_25] : memref<24x1xi32, #tpu.memory_space<vmem>>, vector<24x1xi32>
      tpu.vector_store %arg5[%c0_24, %c0_25], %47 {strides = array<i32>} : memref<24x1xi32, #tpu.memory_space<vmem>>, vector<24x1xi32>,
      %c0_26 = arith.constant 0 : index
      %c0_27 = arith.constant 0 : index
      %49 = vector.load %arg7[%c0_26, %c0_27] : memref<24x1xf32, #tpu.memory_space<vmem>>, vector<24x1xf32>
      %c0_28 = arith.constant 0 : index
      %c0_29 = arith.constant 0 : index
      %50 = vector.load %arg8[%c0_28, %c0_29] : memref<24x1xf32, #tpu.memory_space<vmem>>, vector<24x1xf32>
      %51 = math.log %50 : vector<24x1xf32>
      %52 = arith.addf %49, %51 : vector<24x1xf32>
      %c0_30 = arith.constant 0 : index
      %c0_31 = arith.constant 0 : index
      %53 = vector.load %arg6[%c0_30, %c0_31] : memref<24x1xf32, #tpu.memory_space<vmem>>, vector<24x1xf32>
      tpu.vector_store %arg6[%c0_30, %c0_31], %52 {strides = array<i32>} : memref<24x1xf32, #tpu.memory_space<vmem>>, vector<24x1xf32>,
    } else {
    }
    return
  }
  func.func @transform_0(%arg0: i32, %arg1: i32) -> (i32, i32) {
    %c0_i32 = arith.constant 0 : i32
    %c0_i32_0 = arith.constant 0 : i32
    return %arg0, %c0_i32 : i32, i32
  }
  func.func @transform_1(%arg0: i32, %arg1: i32) -> (i32, i32) {
    %c0_i32 = arith.constant 0 : i32
    %c0_i32_0 = arith.constant 0 : i32
    return %arg1, %c0_i32 : i32, i32
  }
  func.func @transform_2(%arg0: i32, %arg1: i32) -> (i32, i32) {
    %c0_i32 = arith.constant 0 : i32
    %c0_i32_0 = arith.constant 0 : i32
    %c0_i32_1 = arith.constant 0 : i32
    return %c0_i32, %c0_i32_0 : i32, i32
  }
  func.func @transform_3(%arg0: i32, %arg1: i32) -> (i32, i32) {
    %c0_i32 = arith.constant 0 : i32
    %c0_i32_0 = arith.constant 0 : i32
    return %arg0, %c0_i32 : i32, i32
  }
  func.func @transform_4(%arg0: i32, %arg1: i32) -> (i32, i32) {
    %c0_i32 = arith.constant 0 : i32
    %c0_i32_0 = arith.constant 0 : i32
    return %arg0, %c0_i32 : i32, i32
  }
}

</mosaic_0001>

<llo_original>
// kernel: tpu_custom_call.1
$region0: #{tpu_custom_call.1}
  #allocation0 [shape = 'u32[]', space=smem, size = 0x4, offset = 0x4, fixed_abs, tag = 'smem constant byte address 0x4 - core index']
  #allocation1 [shape = 'u32[144,128]{1,0:T(1,128)}', space=vmem, size = 0x12000, scoped, tag = 'internal scratch']
  #allocation2 [shape = 'f32[24,1]{1,0:T(8,128)}', space=vmem, size = 0x3000, scoped, tag = 'scratch operand']
  #allocation3 [shape = 'f32[24,1]{1,0:T(8,128)}', space=vmem, size = 0x3000, scoped, tag = 'scratch operand']
  #allocation4 [shape = 's32[24,1]{1,0:T(8,128)}', space=vmem, size = 0x3000, scoped, tag = 'scratch operand']
  %s0 = inlined_call_operand.vmem [shape: bf16[24,32], index: 0, kind: input, shape index: {}]
  %s1 = inlined_call_operand.vmem [shape: bf16[512,32], index: 1, kind: input, shape index: {}]
  %s2 = inlined_call_operand.vmem [shape: f32[4,128], index: 2, kind: input, shape index: {}]
  %s3 = inlined_call_operand.vmem [shape: s32[24,1], index: 3, kind: output, shape index: {0}]
  %s4 = inlined_call_operand.vmem [shape: f32[24,1], index: 4, kind: output, shape index: {1}]
  %5 = xla_tuple %s3, %s4
  %s6 = sld [smem:[#allocation0]]
  $region61: #{tpu_custom_call.1} parent=0
    _
  %s8 = ssub.s32 1, %s6
  %s9 = scalar_select 0, %s8, %s6
  loop: start=0, step=1, limit=6
  $region2: #{tpu_custom_call.1} parent=0 // loop_pre_header
    _
  $region3: #{tpu_custom_call.1} parent=0 // loop_header
    %s11 = sphi 0, %s15
    %p12 = scmp.ge.s32.totalorder %s11, 6
    %s18 = sphi 0, %s30
    %s19 = sphi 0, %s26
    %s20 = sphi 0, %s18
    %s21 = sphi 0, %s19
    %s22 = sphi 0, %s20
    %s23 = sphi 0, %s21
    %s33 = sphi 0, %s35
    %s36 = sphi 0, %s33
    %s37 = sphi 0, %s36
    %s53 = sphi 0, %s37
    %s59 = sphi 0, %s61
    %s62 = sphi 0, %s59
    %s63 = sphi 0, %s62
    %s79 = sphi 0, %s63
    %s83 = sphi 0, %s83
    %s85 = sphi 0, %s83
    %s86 = sphi 0, %s85
    %s100 = sphi 0, %s86
    %s106 = sphi 0, %s108
    %s109 = sphi 0, %s106
    %s110 = sphi 0, %s109
    %s126 = sphi 0, %s110
    %s132 = sphi 0, %s134
    %s135 = sphi 0, %s132
    %s136 = sphi 0, %s135
    %s152 = sphi 0, %s136
  $region4: #{tpu_custom_call.1} parent=0 // loop_header_branch
    %14 = sbr.rel (%p12) target = $region8
  $region5: #{tpu_custom_call.1} parent=0 // loop_body
    %s16 = ssub.s32 %s11, 1
    %s17 = ssub.s32 %s11, 2
    %s24 = sadd.s32 1, %s19
    %p25 = scmp.ge.s32.totalorder %s24, 4
    %s26 = scalar_select %p25, 0, %s24
    %s27 = sadd.s32 1, %s18
    %s28 = scalar_select %p25, %s27, %s18
    %p29 = scmp.ge.s32.totalorder %s28, 1
    %s30 = scalar_select %p29, 0, %s28
    %s31 = ssub.s32 %s18, %s30
    %p32 = scmp.eq.s32.totalorder %s31, 0
    %s34 = sadd.s32 %s33, 1
    %s35 = scalar_select %p32, %s33, %s34
    %p38 = pneg %p32
    %p39 = scmp.eq.s32.totalorder %s11, 3
    %p40 = por %p38, %p39
    %p41 = scmp.ne.s32.totalorder %s33, %s36
    %p42 = scmp.eq.s32.totalorder %s11, 0
    %p43 = por %p41, %p42
    %p44 = scmp.ne.s32.totalorder %s33, %s36
    %p45 = scmp.eq.s32.totalorder %s16, 3
    %p46 = por %p44, %p45
    %p47 = scmp.ne.s32.totalorder %s36, %s37
    %p48 = scmp.eq.s32.totalorder %s16, 0
    %p49 = por %p47, %p48
    %p50 = scmp.ne.s32.totalorder %s36, %s37
    %p51 = scmp.eq.s32.totalorder %s17, 3
    %p52 = por %p50, %p51
    %p54 = scmp.ne.s32.totalorder %s37, %s53
    %p55 = scmp.eq.s32.totalorder %s17, 0
    %p56 = por %p54, %p55
    %s57 = ssub.s32 %s19, %s26
    %p58 = scmp.eq.s32.totalorder %s57, 0
    %s60 = sadd.s32 %s59, 1
    %s61 = scalar_select %p58, %s59, %s60
    %p64 = pneg %p58
    %p65 = scmp.eq.s32.totalorder %s11, 3
    %p66 = por %p64, %p65
    %p67 = scmp.ne.s32.totalorder %s59, %s62
    %p68 = scmp.eq.s32.totalorder %s11, 0
    %p69 = por %p67, %p68
    %p70 = scmp.ne.s32.totalorder %s59, %s62
    %p71 = scmp.eq.s32.totalorder %s16, 3
    %p72 = por %p70, %p71
    %p73 = scmp.ne.s32.totalorder %s62, %s63
    %p74 = scmp.eq.s32.totalorder %s16, 0
    %p75 = por %p73, %p74
    %p76 = scmp.ne.s32.totalorder %s62, %s63
    %p77 = scmp.eq.s32.totalorder %s17, 3
    %p78 = por %p76, %p77
    %p80 = scmp.ne.s32.totalorder %s63, %s79
    %p81 = scmp.eq.s32.totalorder %s17, 0
    %p82 = por %p80, %p81
    %s84 = sadd.s32 %s83, 1
    %p87 = scmp.eq.s32.totalorder %s11, 3
    %p88 = scmp.ne.s32.totalorder %s83, %s85
    %p89 = scmp.eq.s32.totalorder %s11, 0
    %p90 = por %p88, %p89
    %p91 = scmp.ne.s32.totalorder %s83, %s85
    %p92 = scmp.eq.s32.totalorder %s16, 3
    %p93 = por %p91, %p92
    %p94 = scmp.ne.s32.totalorder %s85, %s86
    %p95 = scmp.eq.s32.totalorder %s16, 0
    %p96 = por %p94, %p95
    %p97 = scmp.ne.s32.totalorder %s85, %s86
    %p98 = scmp.eq.s32.totalorder %s17, 3
    %p99 = por %p97, %p98
    %p101 = scmp.ne.s32.totalorder %s86, %s100
    %p102 = scmp.eq.s32.totalorder %s17, 0
    %p103 = por %p101, %p102
    %s104 = ssub.s32 %s18, %s30
    %p105 = scmp.eq.s32.totalorder %s104, 0
    %s107 = sadd.s32 %s106, 1
    %s108 = scalar_select %p105, %s106, %s107
    %p111 = pneg %p105
    %p112 = scmp.eq.s32.totalorder %s11, 3
    %p113 = por %p111, %p112
    %p114 = scmp.ne.s32.totalorder %s106, %s109
    %p115 = scmp.eq.s32.totalorder %s11, 0
    %p116 = por %p114, %p115
    %p117 = scmp.ne.s32.totalorder %s106, %s109
    %p118 = scmp.eq.s32.totalorder %s16, 3
    %p119 = por %p117, %p118
    %p120 = scmp.ne.s32.totalorder %s109, %s110
    %p121 = scmp.eq.s32.totalorder %s16, 0
    %p122 = por %p120, %p121
    %p123 = scmp.ne.s32.totalorder %s109, %s110
    %p124 = scmp.eq.s32.totalorder %s17, 3
    %p125 = por %p123, %p124
    %p127 = scmp.ne.s32.totalorder %s110, %s126
    %p128 = scmp.eq.s32.totalorder %s17, 0
    %p129 = por %p127, %p128
    %s130 = ssub.s32 %s18, %s30
    %p131 = scmp.eq.s32.totalorder %s130, 0
    %s133 = sadd.s32 %s132, 1
    %s134 = scalar_select %p131, %s132, %s133
    %p137 = pneg %p131
    %p138 = scmp.eq.s32.totalorder %s11, 3
    %p139 = por %p137, %p138
    %p140 = scmp.ne.s32.totalorder %s132, %s135
    %p141 = scmp.eq.s32.totalorder %s11, 0
    %p142 = por %p140, %p141
    %p143 = scmp.ne.s32.totalorder %s132, %s135
    %p144 = scmp.eq.s32.totalorder %s16, 3
    %p145 = por %p143, %p144
    %p146 = scmp.ne.s32.totalorder %s135, %s136
    %p147 = scmp.eq.s32.totalorder %s16, 0
    %p148 = por %p146, %p147
    %p149 = scmp.ne.s32.totalorder %s135, %s136
    %p150 = scmp.eq.s32.totalorder %s17, 3
    %p151 = por %p149, %p150
    %p153 = scmp.ne.s32.totalorder %s136, %s152
    %p154 = scmp.eq.s32.totalorder %s17, 0
    %p155 = por %p153, %p154
    %p156 = scmp.le.s32.totalorder 1, %s11
    %p157 = scmp.lt.s32.totalorder %s11, 5
    %p158 = pnand %p156, %p157
    %p159 = pneg %p158
    // Predicated region
    $region9: #{tpu_custom_call.1} parent=5 // pred_check
      _
    $region10: #{tpu_custom_call.1} parent=5 // pred_check_branch
      %161 = sbr.rel (%p158) target = $region12
    $region11: #{tpu_custom_call.1} parent=5 // pred_region
      %s162 = ssub.s32 %s11, 1
      // Predicated region
      $region13: #{tpu_custom_call.1} parent=11 // pred_check
        %p163 = pneg %p49
      $region14: #{tpu_custom_call.1} parent=11 // pred_check_branch
        %165 = sbr.rel (%p163) target = $region16
      $region15: #{tpu_custom_call.1} parent=11 // pred_region
        %s166 = smul.u32 3, %s20
        %p167 = scmp.lt.s32.totalorder %s166, 2
        %s168 = scalar_select %p167, %s166, 2
        %s169 = smul.addr %s168, 4
        %s170 = scalar_lea.vmem %s0, %s169
        %s171 = smul.u32 3, %s20
      $region16: #{tpu_custom_call.1} parent=11 // pred_fallthru
        _
      // Predicated region
      $region17: #{tpu_custom_call.1} parent=11 // pred_check
        %p172 = pneg %p96
      $region18: #{tpu_custom_call.1} parent=11 // pred_check_branch
        %174 = sbr.rel (%p172) target = $region20
      $region19: #{tpu_custom_call.1} parent=11 // pred_region
        _
      $region20: #{tpu_custom_call.1} parent=11 // pred_fallthru
        _
    $region12: #{tpu_custom_call.1} parent=5 // pred_fallthru
      _
    %p175 = scmp.lt.s32.totalorder %s11, 4
    // Predicated region
    $region21: #{tpu_custom_call.1} parent=5 // pred_check
      %p176 = pneg %p175
    $region22: #{tpu_custom_call.1} parent=5 // pred_check_branch
      %178 = sbr.rel (%p176) target = $region24
    $region23: #{tpu_custom_call.1} parent=5 // pred_region
      // Predicated region
      $region25: #{tpu_custom_call.1} parent=23 // pred_check
        %p179 = pneg %p69
      $region26: #{tpu_custom_call.1} parent=23 // pred_check_branch
        %181 = sbr.rel (%p179) target = $region28
      $region27: #{tpu_custom_call.1} parent=23 // pred_region
        %s182 = smul.u32 16, %s19
        %p183 = scmp.lt.s32.totalorder %s182, 63
        %s184 = scalar_select %p183, %s182, 63
        %s185 = smul.addr %s184, 4
        %s186 = scalar_lea.vmem %s1, %s185
        %s187 = smul.u32 16, %s19
      $region28: #{tpu_custom_call.1} parent=23 // pred_fallthru
        _
    $region24: #{tpu_custom_call.1} parent=5 // pred_fallthru
      _
    %p188 = scmp.le.s32.totalorder 1, %s11
    %p189 = scmp.lt.s32.totalorder %s11, 5
    %p190 = pnand %p188, %p189
    %p191 = pneg %p190
    // Predicated region
    $region29: #{tpu_custom_call.1} parent=5 // pred_check
      _
    $region30: #{tpu_custom_call.1} parent=5 // pred_check_branch
      %193 = sbr.rel (%p190) target = $region32
    $region31: #{tpu_custom_call.1} parent=5 // pred_region
      %s194 = ssub.s32 %s11, 1
      %s195 = smul.u32 3, %s20
      %p196 = scmp.lt.s32.totalorder %s195, 2
      %s197 = scalar_select %p196, %s195, 2
      %s198 = smul.addr %s197, 4
      %s199 = scalar_lea.vmem %s0, %s198
      %p200 = pneg %p49
      %p201 = pneg %p46
      %s202 = smul.u32 16, %s21
      %p203 = scmp.lt.s32.totalorder %s202, 63
      %s204 = scalar_select %p203, %s202, 63
      %s205 = smul.addr %s204, 4
      %s206 = scalar_lea.vmem %s1, %s205
      %p207 = pneg %p75
      %p208 = pneg %p72
      %p209 = pneg %p96
      %p210 = pneg %p93
      %p211 = pneg %p122
      %p212 = pneg %p119
      %s213 = smul.u32 3, %s20
      %p214 = scmp.lt.s32.totalorder %s213, 2
      %s215 = scalar_select %p214, %s213, 2
      %s216 = smul.addr %s215, 8
      %s217 = scalar_lea.vmem %s3, %s216
      %p218 = pneg %p148
      %p219 = pneg %p145
      %s220 = smul.u32 3, %s20
      %p221 = scmp.lt.s32.totalorder %s220, 2
      %s222 = scalar_select %p221, %s220, 2
      %s223 = smul.addr %s222, 8
      %s224 = scalar_lea.vmem %s4, %s223
      %s225 = smul.u32 3, %s20
      %p226 = scmp.lt.s32.totalorder %s225, 2
      %s227 = scalar_select %p226, %s225, 2
      %s228 = smul.addr %s227, 4
      %s229 = scalar_lea.vmem %s0, %s228
      %s230 = smul.u32 3, %s20
      %s231 = smul.u32 16, %s21
      %p232 = scmp.lt.s32.totalorder %s231, 63
      %s233 = scalar_select %p232, %s231, 63
      %s234 = smul.addr %s233, 4
      %s235 = scalar_lea.vmem %s1, %s234
      %s236 = smul.u32 16, %s21
      %s237 = smul.u32 3, %s20
      %p238 = scmp.lt.s32.totalorder %s237, 2
      %s239 = scalar_select %p238, %s237, 2
      %s240 = smul.addr %s239, 8
      %s241 = scalar_lea.vmem %s3, %s240
      %s242 = smul.u32 3, %s20
      %s243 = smul.u32 3, %s20
      %p244 = scmp.lt.s32.totalorder %s243, 2
      %s245 = scalar_select %p244, %s243, 2
      %s246 = smul.addr %s245, 8
      %s247 = scalar_lea.vmem %s4, %s246
      %s248 = smul.u32 3, %s20
      %p250 = scmp.eq.s32.totalorder %s21, 0
      // Predicated region
      $region33: #{tpu_custom_call.1} parent=31 // pred_check
        %p251 = pneg %p250
      $region34: #{tpu_custom_call.1} parent=31 // pred_check_branch
        %253 = sbr.rel (%p251) target = $region36
      $region35: #{tpu_custom_call.1} parent=31 // pred_region
        %vm254 = vcmask 7168
        %255 = vst.msk [vmem:[#allocation2] sm:$0xff] %vm254, -inf
        %256 = vst.msk [vmem:[#allocation2 + $0x8] sm:$0xff] %vm254, -inf
        %257 = vst.msk [vmem:[#allocation2 + $0x10] sm:$0xff] %vm254, -inf
        %258 = vst.msk [vmem:[#allocation4] sm:$0xff] %vm254, 0
        %259 = vst.msk [vmem:[#allocation4 + $0x8] sm:$0xff] %vm254, 0
        %260 = vst.msk [vmem:[#allocation4 + $0x10] sm:$0xff] %vm254, 0
        %261 = vst.msk [vmem:[#allocation3] sm:$0xff] %vm254, 0.0
        %262 = vst.msk [vmem:[#allocation3 + $0x8] sm:$0xff] %vm254, 0.0
        %263 = vst.msk [vmem:[#allocation3 + $0x10] sm:$0xff] %vm254, 0.0
      $region36: #{tpu_custom_call.1} parent=31 // pred_fallthru
        _
      %v264 = vld [vmem:[%s229] sm:$0xf]
      %v265 = vld [vmem:[%s229 + $0x4] sm:$0xf]
      %v266 = vld [vmem:[%s229 + $0x8] sm:$0xf]
      %v267 = vld [vmem:[%s235] sm:$0xf]
      %v268 = vld [vmem:[%s235 + $0x4] sm:$0xf]
      %v269 = vld [vmem:[%s235 + $0x8] sm:$0xf]
      %v270 = vld [vmem:[%s235 + $0xc] sm:$0xf]
      %v271 = vld [vmem:[%s235 + $0x10] sm:$0xf]
      %v272 = vld [vmem:[%s235 + $0x14] sm:$0xf]
      %v273 = vld [vmem:[%s235 + $0x18] sm:$0xf]
      %v274 = vld [vmem:[%s235 + $0x1c] sm:$0xf]
      %v275 = vld [vmem:[%s235 + $0x20] sm:$0xf]
      %v276 = vld [vmem:[%s235 + $0x24] sm:$0xf]
      %v277 = vld [vmem:[%s235 + $0x28] sm:$0xf]
      %v278 = vld [vmem:[%s235 + $0x2c] sm:$0xf]
      %v279 = vld [vmem:[%s235 + $0x30] sm:$0xf]
      %v280 = vld [vmem:[%s235 + $0x34] sm:$0xf]
      %v281 = vld [vmem:[%s235 + $0x38] sm:$0xf]
      %v282 = vld [vmem:[%s235 + $0x3c] sm:$0xf]
      %s283 = scalar_lea.vmem %s2, %s21
      %v284 = vld [vmem:[%s283] sm:$0x1]
      %v285 = vlaneseq
      %v286 = vshrl.u32 %v285, 7
      %v287 = vsub.s32 0, %v286
      %v288 = vrot.slane %v284, %v287
      %v292 = vunpack.c.l.b16 %v264
      %v293 = vunpack.c.l.b16 %v265
      %v294 = vunpack.c.l.b16 %v266
      %v295 = vpack.c.b16 %v293, %v292
      %v296 = vpack.c.b16 %v294, %v294
      %v313 = vunpack.c.l.b16 %v267
      %v314 = vunpack.c.l.b16 %v268
      %v315 = vunpack.c.l.b16 %v269
      %v316 = vunpack.c.l.b16 %v270
      %v317 = vunpack.c.l.b16 %v271
      %v318 = vunpack.c.l.b16 %v272
      %v319 = vunpack.c.l.b16 %v273
      %v320 = vunpack.c.l.b16 %v274
      %v321 = vunpack.c.l.b16 %v275
      %v322 = vunpack.c.l.b16 %v276
      %v323 = vunpack.c.l.b16 %v277
      %v324 = vunpack.c.l.b16 %v278
      %v325 = vunpack.c.l.b16 %v279
      %v326 = vunpack.c.l.b16 %v280
      %v327 = vunpack.c.l.b16 %v281
      %v328 = vunpack.c.l.b16 %v282
      %v329 = vpack.c.b16 %v314, %v313
      %v330 = vpack.c.b16 %v316, %v315
      %v331 = vpack.c.b16 %v318, %v317
      %v332 = vpack.c.b16 %v320, %v319
      %v333 = vpack.c.b16 %v322, %v321
      %v334 = vpack.c.b16 %v324, %v323
      %v335 = vpack.c.b16 %v326, %v325
      %v336 = vpack.c.b16 %v328, %v327
      %vm337 = vcmask 261120
      %v339 = vsel %vm337, %v295, 0
      %v342 = vsel %vm337, %v296, 0
      %v345 = vsel %vm337, %v329, 0
      %v348 = vsel %vm337, %v330, 0
      %v351 = vsel %vm337, %v331, 0
      %v354 = vsel %vm337, %v332, 0
      %v357 = vsel %vm337, %v333, 0
      %v360 = vsel %vm337, %v334, 0
      %v363 = vsel %vm337, %v335, 0
      %v366 = vsel %vm337, %v336, 0
      %368 = vmatprep.subr.bf16.mxu0 0
      %369 = vmatpush1.bf16.xpose.msra.mxu0 %v366
      %370 = vmatprep.subr.bf16.mxu0 0
      %371 = vmatpush1.bf16.xpose.msra.mxu0 %v363
      %372 = vmatprep.subr.bf16.mxu0 0
      %373 = vmatpush1.bf16.xpose.msra.mxu0 %v360
      %374 = vmatprep.subr.bf16.mxu0 0
      %375 = vmatpush1.bf16.xpose.msra.mxu0 %v357
      %376 = vmatprep.subr.bf16.mxu0 0
      %377 = vmatpush1.bf16.xpose.msra.mxu0 %v354
      %378 = vmatprep.subr.bf16.mxu0 0
      %379 = vmatpush1.bf16.xpose.msra.mxu0 %v351
      %380 = vmatprep.subr.bf16.mxu0 0
      %381 = vmatpush1.bf16.xpose.msra.mxu0 %v348
      %382 = vmatprep.subr.bf16.mxu0 0
      %383 = vmatpush1.bf16.xpose.msra.mxu0 %v345
      %384 = vmatprep.subr.bf16.mxu0 0
      %385 = vmatpush2.bf16.xpose.msra.mxu0 0
      %386 = vmatprep.subr.bf16.mxu0 0
      %387 = vmatpush2.bf16.xpose.msra.mxu0 0
      %388 = vmatprep.subr.bf16.mxu0 0
      %389 = vmatpush2.bf16.xpose.msra.mxu0 0
      %390 = vmatprep.subr.bf16.mxu0 0
      %391 = vmatpush2.bf16.xpose.msra.mxu0 0
      %392 = vmatprep.subr.bf16.mxu0 0
      %393 = vmatpush2.bf16.xpose.msra.mxu0 0
      %394 = vmatprep.subr.bf16.mxu0 0
      %395 = vmatpush2.bf16.xpose.msra.mxu0 0
      %396 = vmatprep.subr.bf16.mxu0 0
      %397 = vmatpush2.bf16.xpose.msra.mxu0 0
      %398 = vmatprep.subr.bf16.mxu0 0
      %399 = vmatpush2.bf16.xpose.msra.mxu0 0
      %400 = vmatprep.mubr.bf16.mxu0 0
      %401 = vmatmul.mubr.bf16.gmra.mxu0 %v339
      %v402 = vpop.f32.mrf.mxu0
      %v403 = vadd.f32 %v288, %v402
      %v404 = vpop.f32.mrf.mxu0
      %v405 = vpop.f32.mrf.mxu0
      %v406 = vadd.f32 %v288, %v405
      %v407 = vpop.f32.mrf.mxu0
      %408 = vmatprep.mubr.bf16.mxu0 0
      %409 = vmatmul.mubr.bf16.gmra.mxu0 %v342
      %v410 = vpop.f32.mrf.mxu0
      %v411 = vadd.f32 %v288, %v410
      %v412 = vpop.f32.mrf.mxu0
      %v413 = vpop.f32.mrf.mxu0
      %v414 = vpop.f32.mrf.mxu0
      %415 = vdwg.mxu0
      %v416 = vlaneseq
      %v417 = vand.u32 %v416, 127
      %s418 = smul.u32 %s21, 128
      %v419 = vstv %s418
      %v420 = vadd.s32 %v417, %v419
      %v421 = vcvt.s32.f32 %v420
      %422 = vmax.xlane.f32.xlu0 %v403
      %v423 = vpop.xlane.xlu0 %422
      %424 = vmax.xlane.f32.xlu0 %v406
      %v425 = vpop.xlane.xlu0 %424
      %426 = vmax.xlane.f32.xlu0 %v411
      %v427 = vpop.xlane.xlu0 %426
      %vm428 = vcmp.eq.f32.partialorder %v403, %v423
      %vm429 = vcmp.eq.f32.partialorder %v406, %v425
      %vm430 = vcmp.eq.f32.partialorder %v411, %v427
      %v431 = vsel %vm428, %v421, 1.0737418e+09
      %v432 = vsel %vm429, %v421, 1.0737418e+09
      %v433 = vsel %vm430, %v421, 1.0737418e+09
      %434 = vmin.xlane.f32.xlu0 %v431
      %v435 = vpop.xlane.xlu0 %434
      %436 = vmin.xlane.f32.xlu0 %v432
      %v437 = vpop.xlane.xlu0 %436
      %438 = vmin.xlane.f32.xlu0 %v433
      %v439 = vpop.xlane.xlu0 %438
      %v440 = vcvt.f32.s32.to.zero.pseudo %v435
      %v441 = vcvt.f32.s32.to.zero.pseudo %v437
      %v442 = vcvt.f32.s32.to.zero.pseudo %v439
      %v443 = vld [vmem:[#allocation2] sm:$0xff]
      %v444 = vld [vmem:[#allocation2 + $0x8] sm:$0xff]
      %v445 = vld [vmem:[#allocation2 + $0x10] sm:$0xff]
      %v446 = vmax.f32 %v443, %v423
      %v447 = vmax.f32 %v444, %v425
      %v448 = vmax.f32 %v445, %v427
      %vm449 = vcmp.gt.f32.partialorder %v423, %v443
      %vm450 = vcmp.gt.f32.partialorder %v425, %v444
      %vm451 = vcmp.gt.f32.partialorder %v427, %v445
      %v452 = vld [vmem:[#allocation4] sm:$0xff]
      %v453 = vld [vmem:[#allocation4 + $0x8] sm:$0xff]
      %v454 = vld [vmem:[#allocation4 + $0x10] sm:$0xff]
      %v455 = vsel %vm449, %v440, %v452
      %v456 = vsel %vm450, %v441, %v453
      %v457 = vsel %vm451, %v442, %v454
      %vm458 = vcmask 7168
      %459 = vst.msk [vmem:[#allocation4] sm:$0xff] %vm458, %v455
      %460 = vst.msk [vmem:[#allocation4 + $0x8] sm:$0xff] %vm458, %v456
      %461 = vst.msk [vmem:[#allocation4 + $0x10] sm:$0xff] %vm458, %v457
      %462 = vst.msk [vmem:[#allocation2] sm:$0xff] %vm458, %v446
      %463 = vst.msk [vmem:[#allocation2 + $0x8] sm:$0xff] %vm458, %v447
      %464 = vst.msk [vmem:[#allocation2 + $0x10] sm:$0xff] %vm458, %v448
      %v465 = vsub.f32 %v443, %v446
      %v466 = vsub.f32 %v444, %v447
      %v467 = vsub.f32 %v445, %v448
      %v468 = vmul.f32 %v465, 1.442695
      %v469 = vpow.pop %v468
      %v470 = vmul.f32 %v466, 1.442695
      %v471 = vpow.pop %v470
      %v472 = vmul.f32 %v467, 1.442695
      %v473 = vpow.pop %v472
      %v474 = vld [vmem:[#allocation3] sm:$0xff]
      %v475 = vld [vmem:[#allocation3 + $0x8] sm:$0xff]
      %v476 = vld [vmem:[#allocation3 + $0x10] sm:$0xff]
      %v477 = vmul.f32 %v474, %v469
      %v478 = vmul.f32 %v475, %v471
      %v479 = vmul.f32 %v476, %v473
      %481 = vset.pattern.permute.xlu0 0
      %482 = vperm.xlu0 %481, %v446
      %v483 = vpop.permute.xlu0 %482
      %486 = vset.pattern.permute.xlu0 0
      %487 = vperm.xlu0 %486, %v447
      %v488 = vpop.permute.xlu0 %487
      %491 = vset.pattern.permute.xlu0 0
      %492 = vperm.xlu0 %491, %v448
      %v493 = vpop.permute.xlu0 %492
      %v495 = vsub.f32 %v403, %v483
      %v496 = vsub.f32 %v406, %v488
      %v497 = vsub.f32 %v411, %v493
      %v498 = vmul.f32 %v495, 1.442695
      %v499 = vpow.pop %v498
      %v500 = vmul.f32 %v496, 1.442695
      %v501 = vpow.pop %v500
      %v502 = vmul.f32 %v497, 1.442695
      %v503 = vpow.pop %v502
      %504 = vadd.xlane.f32.xlu0 %v499
      %v505 = vpop.xlane.xlu0 %504
      %506 = vadd.xlane.f32.xlu0 %v501
      %v507 = vpop.xlane.xlu0 %506
      %508 = vadd.xlane.f32.xlu0 %v503
      %v509 = vpop.xlane.xlu0 %508
      %v510 = vadd.f32 %v477, %v505
      %v511 = vadd.f32 %v478, %v507
      %v512 = vadd.f32 %v479, %v509
      %513 = vst.msk [vmem:[#allocation3] sm:$0xff] %vm458, %v510
      %514 = vst.msk [vmem:[#allocation3 + $0x8] sm:$0xff] %vm458, %v511
      %515 = vst.msk [vmem:[#allocation3 + $0x10] sm:$0xff] %vm458, %v512
      %p516 = scmp.eq.s32.totalorder %s21, 3
      // Predicated region
      $region37: #{tpu_custom_call.1} parent=31 // pred_check
        %p517 = pneg %p516
      $region38: #{tpu_custom_call.1} parent=31 // pred_check_branch
        %519 = sbr.rel (%p517) target = $region40
      $region39: #{tpu_custom_call.1} parent=31 // pred_region
        %v520 = vld [vmem:[#allocation4] sm:$0xff]
        %v521 = vld [vmem:[#allocation4 + $0x8] sm:$0xff]
        %v522 = vld [vmem:[#allocation4 + $0x10] sm:$0xff]
        %523 = vst.msk [vmem:[%s241] sm:$0xff] %vm458, %v520
        %524 = vst.msk [vmem:[%s241 + $0x8] sm:$0xff] %vm458, %v521
        %525 = vst.msk [vmem:[%s241 + $0x10] sm:$0xff] %vm458, %v522
        %v526 = vld [vmem:[#allocation2] sm:$0xff]
        %v527 = vld [vmem:[#allocation2 + $0x8] sm:$0xff]
        %v528 = vld [vmem:[#allocation2 + $0x10] sm:$0xff]
        %v529 = vld [vmem:[#allocation3] sm:$0xff]
        %v530 = vld [vmem:[#allocation3 + $0x8] sm:$0xff]
        %v531 = vld [vmem:[#allocation3 + $0x10] sm:$0xff]
        %v532 = vlog2.pop %v529
        %v533 = vmul.f32 %v532, 0.6931472
        %v534 = vlog2.pop %v530
        %v535 = vmul.f32 %v534, 0.6931472
        %v536 = vlog2.pop %v531
        %v537 = vmul.f32 %v536, 0.6931472
        %v538 = vadd.f32 %v526, %v533
        %v539 = vadd.f32 %v527, %v535
        %v540 = vadd.f32 %v528, %v537
        %541 = vst.msk [vmem:[%s247] sm:$0xff] %vm458, %v538
        %542 = vst.msk [vmem:[%s247 + $0x8] sm:$0xff] %vm458, %v539
        %543 = vst.msk [vmem:[%s247 + $0x10] sm:$0xff] %vm458, %v540
      $region40: #{tpu_custom_call.1} parent=31 // pred_fallthru
        _
      %s544 = smul.u32 3, %s20
      %p545 = scmp.lt.s32.totalorder %s544, 2
      %s546 = scalar_select %p545, %s544, 2
      %s547 = smul.addr %s546, 8
      %s548 = scalar_lea.vmem %s3, %s547
      %s549 = smul.u32 3, %s20
      %p550 = scmp.lt.s32.totalorder %s549, 2
      %s551 = scalar_select %p550, %s549, 2
      %s552 = smul.addr %s551, 8
      %s553 = scalar_lea.vmem %s4, %s552
      // Predicated region
      $region41: #{tpu_custom_call.1} parent=31 // pred_check
        %p554 = pneg %p119
      $region42: #{tpu_custom_call.1} parent=31 // pred_check_branch
        %556 = sbr.rel (%p554) target = $region44
      $region43: #{tpu_custom_call.1} parent=31 // pred_region
        %s557 = smul.u32 3, %s20
      $region44: #{tpu_custom_call.1} parent=31 // pred_fallthru
        _
      // Predicated region
      $region45: #{tpu_custom_call.1} parent=31 // pred_check
        %p558 = pneg %p145
      $region46: #{tpu_custom_call.1} parent=31 // pred_check_branch
        %560 = sbr.rel (%p558) target = $region48
      $region47: #{tpu_custom_call.1} parent=31 // pred_region
        %s561 = smul.u32 3, %s20
      $region48: #{tpu_custom_call.1} parent=31 // pred_fallthru
        _
      // Predicated region
      $region49: #{tpu_custom_call.1} parent=31 // pred_check
        %p562 = pneg %p119
      $region50: #{tpu_custom_call.1} parent=31 // pred_check_branch
        %564 = sbr.rel (%p562) target = $region52
      $region51: #{tpu_custom_call.1} parent=31 // pred_region
        %s565 = smul.u32 3, %s20
        %p566 = scmp.lt.s32.totalorder %s565, 2
        %s567 = scalar_select %p566, %s565, 2
        %s568 = smul.addr %s567, 8
        %s569 = scalar_lea.vmem %s3, %s568
      $region52: #{tpu_custom_call.1} parent=31 // pred_fallthru
        _
      // Predicated region
      $region53: #{tpu_custom_call.1} parent=31 // pred_check
        %p570 = pneg %p145
      $region54: #{tpu_custom_call.1} parent=31 // pred_check_branch
        %572 = sbr.rel (%p570) target = $region56
      $region55: #{tpu_custom_call.1} parent=31 // pred_region
        %s573 = smul.u32 3, %s20
        %p574 = scmp.lt.s32.totalorder %s573, 2
        %s575 = scalar_select %p574, %s573, 2
        %s576 = smul.addr %s575, 8
        %s577 = scalar_lea.vmem %s4, %s576
      $region56: #{tpu_custom_call.1} parent=31 // pred_fallthru
        _
    $region32: #{tpu_custom_call.1} parent=5 // pred_fallthru
      _
    %p578 = scmp.le.s32.totalorder 2, %s11
    // Predicated region
    $region57: #{tpu_custom_call.1} parent=5 // pred_check
      %p579 = pneg %p578
    $region58: #{tpu_custom_call.1} parent=5 // pred_check_branch
      %581 = sbr.rel (%p579) target = $region60
    $region59: #{tpu_custom_call.1} parent=5 // pred_region
      %s582 = ssub.s32 %s11, 2
    $region60: #{tpu_custom_call.1} parent=5 // pred_fallthru
      _
  $region6: #{tpu_custom_call.1} parent=0 // loop_footer
    %s15 = sadd.s32 1, %s11
  $region7: #{tpu_custom_call.1} parent=0 // loop_footer_branch
    %10 = sbr.rel target = $region3
  $region8: #{tpu_custom_call.1} parent=0 // loop_exit
    _

</llo_original>
